<compile_context>
chip_gen: v7x
topology: tpu7x:2x2x1
jax: 0.10.0
libtpu: 0.0.40
codegen_flags: <defaults>
</compile_context>

<pallas_src>
import functools

import jax
import jax.numpy as jnp
from jax.experimental import pallas as pl
from jax.experimental.pallas import tpu as pltpu

_MIB = 1024 * 1024


def _round_up(v, m):
    return (v + m - 1) // m * m


def _vmem_budget_bytes():
    """Per-core VMEM budget for double-buffered tiles, generation-aware.

    ~70% of physical VMEM (leaves headroom for compiler scratch), with a
    conservative 64 MiB (v7x) fallback if the query is unavailable.
    """
    cap = 64 * _MIB  # conservative default: v7x per-TC VMEM
    try:
        cap = int(pltpu.get_tpu_info().vmem_capacity_bytes)
    except Exception:
        pass
    return min(int(cap * 0.7), 96 * _MIB)


def _pick_tiles(M, K, E_pad, in_bytes, out_bytes, budget):
    """Choose (tm, tn) for the (M/tm, E_pad/tn) grid with a full-K block."""
    # Prefer full-E residency (weight fetched once, activation fetched once).
    tn = 128
    for c in (E_pad, 2048, 1024, 512, 256, 128):
        if c <= E_pad and E_pad % c == 0 and 2 * K * c * in_bytes <= budget // 3:
            tn = c
            break

    def fits(tm):
        # double-buffered x tile + weight tile + out tile + bias
        return 2 * (tm * K * in_bytes + K * tn * in_bytes
                    + tm * tn * out_bytes + tn * 4) <= budget

    if M <= 1024:
        # Single block along M; block == full array dim is always layout-legal
        # (covers small / unaligned M, e.g. tiny batches).
        tm = M
    else:
        tm = 256
        for c in (2048, 1024, 512, 256):
            # Keep >= 2 M-blocks so both v7x TensorCores get work.
            if fits(c) and pl.cdiv(M, c) >= 2:
                tm = c
                break
    return tm, tn


def _patch_embed_kernel(x_ref, w_ref, b_ref, o_ref):
    # x_ref: [tm, K], w_ref: [K, tn], b_ref: [1, tn] (f32), o_ref: [tm, tn].
    # Single-step reduction: no accumulator scratch, no init/finalize branches.
    acc = jnp.dot(x_ref[...], w_ref[...], preferred_element_type=jnp.float32)
    o_ref[...] = (acc + b_ref[...]).astype(o_ref.dtype)


def patch_embed(x, weight, bias, *, patch_size, stride,
                compute_dtype=jnp.bfloat16, out_dtype=None):
    """Forward of PatchEmbed.

    x:      [B, C, H, W]           (NCHW, like PyTorch)
    weight: [embed_dim, C, ph, pw] (PyTorch Conv2d weight layout)
    bias:   [embed_dim]
    returns [B, embed_dim, H//stride, W//stride]

    compute_dtype: MXU input dtype (default bf16; accumulation stays f32).
    out_dtype:     output dtype (default: x.dtype).
    """
    assert patch_size == stride, "kernel specializes to non-overlapping patches"
    B, C, H, W = x.shape
    E = weight.shape[0]
    ph = pw = patch_size
    Hp, Wp = H // ph, W // pw

    cdt = jnp.dtype(compute_dtype) if compute_dtype is not None else jnp.dtype(x.dtype)
    odt = jnp.dtype(out_dtype) if out_dtype is not None else jnp.dtype(x.dtype)

    # --- glue: patchify (layout only) ---------------------------------------
    # TODO(synk): NHWC producers/consumers would remove these layout-hostile
    # transposes; alternatively fold the patch gather into the kernel via the
    # BlockSpec index_map and flatten [C,ph,pw]->K in-kernel.
    xp = x.reshape(B, C, Hp, ph, Wp, pw)
    xp = jnp.transpose(xp, (0, 2, 4, 1, 3, 5))            # [B, Hp, Wp, C, ph, pw]
    M = B * Hp * Wp
    K = C * ph * pw
    # No K or M padding of the activation: full-K block + cdiv M grid.
    xm = xp.reshape(M, K).astype(cdt)

    # Conv2d weight [E, C, ph, pw] -> [K, E_pad]; only the tiny weight / bias
    # get zero-padded in E so the output last dim is lane-dense (mult of 128).
    E_pad = _round_up(E, 128)
    wm = jnp.transpose(weight.reshape(E, K), (1, 0)).astype(cdt)
    wm = jnp.pad(wm, ((0, 0), (0, E_pad - E)))
    bm = jnp.pad(bias.astype(jnp.float32).reshape(1, E), ((0, 0), (0, E_pad - E)))

    budget = _vmem_budget_bytes()
    tm, tn = _pick_tiles(M, K, E_pad, cdt.itemsize, odt.itemsize, budget)
    grid = (pl.cdiv(M, tm), E_pad // tn)

    # --- Pallas hot path: single-pass matmul + bias -------------------------
    out = pl.pallas_call(
        _patch_embed_kernel,
        out_shape=jax.ShapeDtypeStruct((M, E_pad), odt),
        grid_spec=pltpu.PrefetchScalarGridSpec(
            num_scalar_prefetch=0,
            grid=grid,
            in_specs=[
                pl.BlockSpec((tm, K), lambda i, j: (i, 0)),   # full-K block
                pl.BlockSpec((K, tn), lambda i, j: (0, j)),
                pl.BlockSpec((1, tn), lambda i, j: (0, j)),
            ],
            out_specs=pl.BlockSpec((tm, tn), lambda i, j: (i, j)),
        ),
        compiler_params=pltpu.CompilerParams(
            dimension_semantics=("parallel", "parallel"),
            vmem_limit_bytes=int(budget)),
    )(xm, wm, bm)

    # norm_layer=None -> nn.Identity(): nothing to do.
    # TODO(synk): if a norm_layer (e.g. LayerNorm over embed_dim) is supplied,
    # fuse it into the kernel epilogue.

    # --- glue: drop E padding, back to NCHW ----------------------------------
    out = out[:, :E].reshape(B, Hp, Wp, E)
    out = jnp.transpose(out, (0, 3, 1, 2))                 # [B, E, Hp, Wp]
    return out


def _reference_conv(x, weight, bias, stride):
    y = jax.lax.conv_general_dilated(
        x.astype(jnp.float32),
        weight.astype(jnp.float32),
        window_strides=(stride, stride),
        padding="VALID",
        dimension_numbers=("NCHW", "OIHW", "NCHW"),
    )
    return y + bias.reshape(1, -1, 1, 1)


if __name__ == "__main__":
    # Small shapes consistent with the module: B=2, C=4, H=W=16,
    # patch_size=stride=4, embed_dim=32.
    B, C, H, W = 2, 4, 16, 16
    patch_size = stride = 4
    embed_dim = 32

    key = jax.random.PRNGKey(0)
    kx, kw, kb = jax.random.split(key, 3)
    x = jax.random.normal(kx, (B, C, H, W), dtype=jnp.float32)
    weight = jax.random.normal(
        kw, (embed_dim, C, patch_size, patch_size), dtype=jnp.float32) * 0.05
    bias = jax.random.normal(kb, (embed_dim,), dtype=jnp.float32) * 0.05

    ref = _reference_conv(x, weight, bias, stride)

    # Default path: bf16 MXU inputs, f32 accumulation -> tolerance check.
    fwd_bf16 = jax.jit(functools.partial(
        patch_embed, patch_size=patch_size, stride=stride))
    out_bf16 = jax.block_until_ready(fwd_bf16(x, weight, bias))
    assert out_bf16.shape == (B, embed_dim, H // stride, W // stride), out_bf16.shape
    assert jnp.allclose(out_bf16, ref, atol=3e-2, rtol=3e-2), (
        float(jnp.max(jnp.abs(out_bf16 - ref))))

    # f32 compute path: exact check against the conv reference.
    fwd_f32 = jax.jit(functools.partial(
        patch_embed, patch_size=patch_size, stride=stride,
        compute_dtype=jnp.float32))
    out_f32 = jax.block_until_ready(fwd_f32(x, weight, bias))
    assert out_f32.shape == ref.shape, out_f32.shape
    assert jnp.allclose(out_f32, ref, atol=1e-4, rtol=1e-4), (
        float(jnp.max(jnp.abs(out_f32 - ref))))

    print("KERNEL_OK")
</pallas_src>

<mosaic_0001>
module attributes {stable_mosaic.version = 11 : i64} {
  func.func @_patch_embed_kernel(%arg0: i32, %arg1: i32, %arg2: memref<32x64xbf16, #tpu.memory_space<vmem>>, %arg3: memref<64x128xbf16, #tpu.memory_space<vmem>>, %arg4: memref<1x128xf32, #tpu.memory_space<vmem>>, %arg5: memref<32x128xf32, #tpu.memory_space<vmem>>) attributes {dimension_semantics = [#tpu.dimension_semantics<parallel>, #tpu.dimension_semantics<parallel>], iteration_bounds = array<i64: 1, 1>, scalar_prefetch = 0 : i64, scratch_operands = 0 : i64, tpu.core_type = #tpu.core_type<tc>, window_params = [{transform_indices = @transform_0, window_bounds = array<i64: 32, 64>}, {transform_indices = @transform_1, window_bounds = array<i64: 64, 128>}, {transform_indices = @transform_2, window_bounds = array<i64: 1, 128>}, {transform_indices = @transform_3, window_bounds = array<i64: 32, 128>}]} {
    %c0 = arith.constant 0 : index
    %c0_0 = arith.constant 0 : index
    %0 = vector.load %arg2[%c0, %c0_0] : memref<32x64xbf16, #tpu.memory_space<vmem>>, vector<32x64xbf16>
    %c0_1 = arith.constant 0 : index
    %c0_2 = arith.constant 0 : index
    %1 = vector.load %arg3[%c0_1, %c0_2] : memref<64x128xbf16, #tpu.memory_space<vmem>>, vector<64x128xbf16>
    %cst = arith.constant dense<0.000000e+00> : vector<32x128xf32>
    %2 = tpu.matmul %0, %1, %cst {dimension_numbers = #tpu.dot_dimension_numbers<[1], [0], [0], [1], [0, 0, 1, 1], [], []>} : vector<32x64xbf16>, vector<64x128xbf16>, vector<32x128xf32> -> vector<32x128xf32>
    %c0_3 = arith.constant 0 : index
    %c0_4 = arith.constant 0 : index
    %3 = vector.load %arg4[%c0_3, %c0_4] : memref<1x128xf32, #tpu.memory_space<vmem>>, vector<1x128xf32>
    %4 = vector.broadcast %3 : vector<1x128xf32> to vector<32x128xf32>
    %5 = arith.addf %2, %4 : vector<32x128xf32>
    %c0_5 = arith.constant 0 : index
    %c0_6 = arith.constant 0 : index
    %6 = vector.load %arg5[%c0_5, %c0_6] : memref<32x128xf32, #tpu.memory_space<vmem>>, vector<32x128xf32>
    tpu.vector_store %arg5[%c0_5, %c0_6], %5 {strides = array<i32>} : memref<32x128xf32, #tpu.memory_space<vmem>>, vector<32x128xf32>,
    return
  }
  func.func @transform_0(%arg0: i32, %arg1: i32) -> (i32, i32) {
    %c0_i32 = arith.constant 0 : i32
    %c0_i32_0 = arith.constant 0 : i32
    return %arg0, %c0_i32 : i32, i32
  }
  func.func @transform_1(%arg0: i32, %arg1: i32) -> (i32, i32) {
    %c0_i32 = arith.constant 0 : i32
    %c0_i32_0 = arith.constant 0 : i32
    return %c0_i32, %arg1 : i32, i32
  }
  func.func @transform_2(%arg0: i32, %arg1: i32) -> (i32, i32) {
    %c0_i32 = arith.constant 0 : i32
    %c0_i32_0 = arith.constant 0 : i32
    return %c0_i32, %arg1 : i32, i32
  }
  func.func @transform_3(%arg0: i32, %arg1: i32) -> (i32, i32) {
    %c0_i32 = arith.constant 0 : i32
    return %arg0, %arg1 : i32, i32
  }
}

</mosaic_0001>

<llo_original>
// kernel: patch_embed.1
$region0: #{patch_embed.1}
  #allocation0 [shape = 'u32[]', space=smem, size = 0x4, offset = 0x4, fixed_abs, tag = 'smem constant byte address 0x4 - core index']
  #allocation1 [shape = 'u32[144,128]{1,0:T(1,128)}', space=vmem, size = 0x12000, scoped, tag = 'internal scratch']
  %s0 = inlined_call_operand.vmem [shape: bf16[32,64], index: 0, kind: input, shape index: {}]
  %s1 = inlined_call_operand.vmem [shape: bf16[64,128], index: 1, kind: input, shape index: {}]
  %s2 = inlined_call_operand.vmem [shape: f32[1,128], index: 2, kind: input, shape index: {}]
  %s3 = inlined_call_operand.hbm [shape: f32[32,128], index: 3, kind: output, shape index: {}]
  %s4 = sld [smem:[#allocation0]]
  $region22: #{patch_embed.1} parent=0
    _
  %s6 = ssub.s32 1, %s4
  %s7 = scalar_select 0, %s6, %s4
  $region1: #{patch_embed.1} parent=0
    #allocation2 [shape = 'u8[16384]{0}', space=vmem, size = 0x4000, scoped, tag = 'output window, operand 0, single buffered']
    #allocation3 [shape = 's32[1]{0}', space=sflag, size = 0x4, scoped, tag = 'scoped memory for patch_embed.1']
    %8 = vsyncpa [#allocation3], 0
    // Predicated region
    $region2: #{patch_embed.1} parent=1 // pred_check
      _
    $region3: #{patch_embed.1} parent=1 // pred_check_branch
      %10 = sbr.rel (0) target = $region5
    $region4: #{patch_embed.1} parent=1 // pred_region
      _
    $region5: #{patch_embed.1} parent=1 // pred_fallthru
      _
    // Predicated region
    $region6: #{patch_embed.1} parent=1 // pred_check
      _
    $region7: #{patch_embed.1} parent=1 // pred_check_branch
      %12 = sbr.rel (0) target = $region9
    $region8: #{patch_embed.1} parent=1 // pred_region
      _
    $region9: #{patch_embed.1} parent=1 // pred_fallthru
      _
    // Predicated region
    $region10: #{patch_embed.1} parent=1 // pred_check
      _
    $region11: #{patch_embed.1} parent=1 // pred_check_branch
      %14 = sbr.rel (0) target = $region13
    $region12: #{patch_embed.1} parent=1 // pred_region
      _
    $region13: #{patch_embed.1} parent=1 // pred_fallthru
      _
    %v16 = vld [vmem:[%s0] sm:$0xf]
    %v17 = vld [vmem:[%s0 + $0x4] sm:$0xf]
    %v18 = vld [vmem:[%s0 + $0x8] sm:$0xf]
    %v19 = vld [vmem:[%s0 + $0xc] sm:$0xf]
    %v20 = vld [vmem:[%s1] sm:$0xf]
    %v21 = vld [vmem:[%s1 + $0x4] sm:$0xf]
    %v22 = vld [vmem:[%s1 + $0x8] sm:$0xf]
    %v23 = vld [vmem:[%s1 + $0xc] sm:$0xf]
    %v24 = vld [vmem:[%s1 + $0x10] sm:$0xf]
    %v25 = vld [vmem:[%s1 + $0x14] sm:$0xf]
    %v26 = vld [vmem:[%s1 + $0x18] sm:$0xf]
    %v27 = vld [vmem:[%s1 + $0x1c] sm:$0xf]
    %v28 = vld [vmem:[%s2] sm:$0x1]
    %v30 = vlaneseq
    %v31 = vshrl.u32 %v30, 7
    %v32 = vsub.s32 0, %v31
    %v33 = vrot.slane %v28, %v32
    %v39 = vunpack.c.l.b16 %v16
    %v40 = vunpack.c.l.b16 %v17
    %v41 = vunpack.c.l.b16 %v18
    %v42 = vunpack.c.l.b16 %v19
    %v43 = vpack.c.b16 %v40, %v39
    %v44 = vpack.c.b16 %v42, %v41
    %v53 = vunpack.c.l.b16 %v20
    %v54 = vunpack.c.l.b16 %v21
    %v55 = vunpack.c.l.b16 %v22
    %v56 = vunpack.c.l.b16 %v23
    %v57 = vunpack.c.l.b16 %v24
    %v58 = vunpack.c.l.b16 %v25
    %v59 = vunpack.c.l.b16 %v26
    %v60 = vunpack.c.l.b16 %v27
    %v61 = vpack.c.b16 %v54, %v53
    %v62 = vpack.c.b16 %v56, %v55
    %v63 = vpack.c.b16 %v58, %v57
    %v64 = vpack.c.b16 %v60, %v59
    %vm69 = vcmask 523264
    %v71 = vsel %vm69, %v43, 0
    %v74 = vsel %vm69, %v44, 0
    %76 = vmatprep.subr.bf16.mxu0 0
    %77 = vmatpush1.bf16.msra.mxu0 %v61
    %78 = vmatprep.subr.bf16.mxu0 0
    %79 = vmatpush1.bf16.msra.mxu0 %v62
    %80 = vmatprep.subr.bf16.mxu0 0
    %81 = vmatpush1.bf16.msra.mxu0 %v63
    %82 = vmatprep.subr.bf16.mxu0 0
    %83 = vmatpush1.bf16.msra.mxu0 %v64
    %84 = vmatprep.subr.bf16.mxu0 0
    %85 = vmatpush1.bf16.msra.mxu0 0
    %86 = vmatprep.subr.bf16.mxu0 0
    %87 = vmatpush1.bf16.msra.mxu0 0
    %88 = vmatprep.subr.bf16.mxu0 0
    %89 = vmatpush1.bf16.msra.mxu0 0
    %90 = vmatprep.subr.bf16.mxu0 0
    %91 = vmatpush1.bf16.msra.mxu0 0
    %92 = vmatprep.subr.bf16.mxu0 0
    %93 = vmatpush1.bf16.msra.mxu0 0
    %94 = vmatprep.subr.bf16.mxu0 0
    %95 = vmatpush1.bf16.msra.mxu0 0
    %96 = vmatprep.subr.bf16.mxu0 0
    %97 = vmatpush1.bf16.msra.mxu0 0
    %98 = vmatprep.subr.bf16.mxu0 0
    %99 = vmatpush1.bf16.msra.mxu0 0
    %100 = vmatprep.subr.bf16.mxu0 0
    %101 = vmatpush1.bf16.msra.mxu0 0
    %102 = vmatprep.subr.bf16.mxu0 0
    %103 = vmatpush1.bf16.msra.mxu0 0
    %104 = vmatprep.subr.bf16.mxu0 0
    %105 = vmatpush1.bf16.msra.mxu0 0
    %106 = vmatprep.subr.bf16.mxu0 0
    %107 = vmatpush1.bf16.msra.mxu0 0
    %108 = vmatprep.mubr.bf16.mxu0 0
    %109 = vmatmul.mubr.bf16.gmra.mrb[0].mxu0 %v71
    %v110 = vpop.f32.mrb[0].mxu0
    %v111 = vadd.f32 %v33, %v110
    %v112 = vpop.f32.mrb[0].mxu0
    %v113 = vpop.f32.mrb[0].mxu0
    %v114 = vadd.f32 %v33, %v113
    %v115 = vpop.f32.mrb[0].mxu0
    %116 = vmatprep.mubr.bf16.mxu0 0
    %117 = vmatmul.mubr.bf16.gmra.mrb[0].mxu0 %v74
    %v118 = vpop.f32.mrb[0].mxu0
    %v119 = vadd.f32 %v33, %v118
    %v120 = vpop.f32.mrb[0].mxu0
    %v121 = vpop.f32.mrb[0].mxu0
    %v122 = vadd.f32 %v33, %v121
    %v123 = vpop.f32.mrb[0].mxu0
    %124 = vdwg.mxu0
    %125 = vst [vmem:[#allocation2] sm:$0xff] %v111
    %126 = vst [vmem:[#allocation2 + $0x8] sm:$0xff] %v114
    %127 = vst [vmem:[#allocation2 + $0x10] sm:$0xff] %v119
    %128 = vst [vmem:[#allocation2 + $0x18] sm:$0xff] %v122
    // Predicated region
    $region14: #{patch_embed.1} parent=1 // pred_check
      _
    $region15: #{patch_embed.1} parent=1 // pred_check_branch
      %130 = sbr.rel (0) target = $region17
    $region16: #{patch_embed.1} parent=1 // pred_region
      %s132 = ssub.s32 512, 512
      %133 = vsyncadd [#allocation3], %s132
      %s134 = sshll.u32 [#allocation2], 4
      %s135 = int_to_ptr.vmem [resolvable:$true] %s134
      %140 = dma.vmem_to_hbm [thread:$0]  %s135, 512, %s3, [#allocation3], 128, 128, 8
    $region17: #{patch_embed.1} parent=1 // pred_fallthru
      _
    // Predicated region
    $region18: #{patch_embed.1} parent=1 // pred_check
      _
    $region19: #{patch_embed.1} parent=1 // pred_check_branch
      %142 = sbr.rel (0) target = $region21
    $region20: #{patch_embed.1} parent=1 // pred_region
      %143 = dma.done [#allocation3], 512
    $region21: #{patch_embed.1} parent=1 // pred_fallthru
      _
    %144 = vsyncpa [#allocation3], 1

</llo_original>
